<compile_context>
chip_gen: v7x
topology: tpu7x:2x2x1
jax: 0.10.0
libtpu: 0.0.40
codegen_flags: <defaults>
</compile_context>

<pallas_src>
import math
import jax
import jax.numpy as jnp
from jax.experimental import pallas as pl
from jax.experimental.pallas import tpu as pltpu

LANE = 128


def _round_up(n, m):
    return ((n + m - 1) // m) * m


def _cdiv(a, b):
    return -(-a // b)


def _mlp_kernel(x_ref, *refs):
    """refs = (w0, b0, ..., w_{L-1}, b_{L-1}, w_last, b_last, out_ref).

    Activations are transposed: x_ref is (F, tile_b) with the batch on lanes.
      hidden:  h = relu(W_t @ h + b_col)   -- MXU matmul, lane-dense (width, tile_b)
      final :  out = w_row @ h + b         -- (1, tile_b), lane-dense store
    Weights may be bf16 (MXU-native); accumulation / bias / ReLU stay f32.
    """
    out_ref = refs[-1]
    prefs = refs[:-1]
    n_hidden = (len(prefs) - 2) // 2

    h = x_ref[...].astype(jnp.float32)                 # (F, tile_b)
    for i in range(n_hidden):                          # static, fully unrolled
        w = prefs[2 * i][...]                          # (out_pad, in_prev), bf16 or f32
        b = prefs[2 * i + 1][...]                      # (out_pad, 1), f32
        h = jnp.dot(w, h.astype(w.dtype),
                    preferred_element_type=jnp.float32) + b
        h = jnp.maximum(h, 0.0)                        # ReLU (f32, VPU)

    w_last = prefs[-2][...]                            # (1, in_pad), f32
    b_last = prefs[-1][...]                            # (1, 1), f32
    out = jnp.dot(w_last, h, preferred_element_type=jnp.float32) + b_last  # (1, tile_b)
    out_ref[...] = out.astype(out_ref.dtype)


def init_params(key, n_layers, layer_sizes, in_features=32):
    """nn.Linear-style init (uniform +/- 1/sqrt(fan_in)). Returns [(W(in,out), b(out,)), ...]."""
    dims = [in_features] + list(layer_sizes) + [1]
    params = []
    for i in range(len(dims) - 1):
        fan_in, fan_out = dims[i], dims[i + 1]
        key, kw, kb = jax.random.split(key, 3)
        bound = 1.0 / math.sqrt(fan_in)
        w = jax.random.uniform(kw, (fan_in, fan_out), jnp.float32, -bound, bound)
        b = jax.random.uniform(kb, (fan_out,), jnp.float32, -bound, bound)
        params.append((w, b))
    return params


def pad_params_for_kernel(params, *, weight_dtype=jnp.bfloat16):
    """Transposed, lane-padded operands for the kernel.

    Hidden layer i:  W_t (out_pad, in_prev)  [weight_dtype],  b (out_pad, 1) [f32]
    Final layer   :  w_row (1, in_pad) [f32],                 b (1, 1)       [f32]
    Zero padding is semantically exact (padded rows stay 0 through bias/ReLU).
    """
    ops = []
    prev_in = params[0][0].shape[0]                    # x feature dim (32), left unpadded
    for w, b in params[:-1]:                           # hidden Linear layers
        fan_in, fan_out = w.shape
        out_pad = _round_up(fan_out, LANE)
        w_t = jnp.zeros((out_pad, prev_in), jnp.float32).at[:fan_out, :fan_in].set(w.T)
        b_c = jnp.zeros((out_pad, 1), jnp.float32).at[:fan_out, 0].set(b)
        ops += [w_t.astype(weight_dtype), b_c]
        prev_in = out_pad
    w, b = params[-1]                                  # final Linear, out_features == 1
    fan_in = w.shape[0]
    w_row = jnp.zeros((1, prev_in), jnp.float32).at[0, :fan_in].set(w[:, 0])
    ops += [w_row, b.reshape(1, 1).astype(jnp.float32)]
    return ops


def mlp_forward(x, padded_ops, *, tile_b=2048):
    """One fused pallas_call; batch (on lanes) is gridded, weights stay VMEM-resident."""
    B, F = x.shape

    # --- grid / tile selection: pad B only to a lane multiple, split evenly. ---
    b_lane = _round_up(B, LANE)
    tile_req = min(_round_up(max(tile_b, LANE), LANE), b_lane)
    steps = _cdiv(b_lane, tile_req)
    tile_b = _round_up(_cdiv(b_lane, steps), LANE)     # equal lane-aligned tiles
    b_pad = steps * tile_b                             # waste < 128 rows per step
    grid = (steps,)

    # Batch on lanes: (F, B_pad). Host-side pad + transpose is trivial.
    x_t = jnp.pad(x, ((0, b_pad - B), (0, 0))).T

    in_specs = [pl.BlockSpec((F, tile_b), lambda i: (0, i))]            # pipelined x tile
    in_specs += [pl.BlockSpec(op.shape, lambda i: (0, 0))               # resident weights
                 for op in padded_ops]
    out_spec = pl.BlockSpec((1, tile_b), lambda i: (0, i))              # lane-dense output

    # --- advisory cost estimate ---
    flops = sum(2 * b_pad * op.shape[0] * op.shape[1] for op in padded_ops[0::2])
    weight_bytes = sum(op.size * op.dtype.itemsize for op in padded_ops)
    bytes_accessed = x_t.size * 4 + weight_bytes + b_pad * 4

    # --- VMEM budget: resident weights (x2 default buffering) + double-buffered
    #     x/out tiles + live f32/bf16 activation tiles inside the body. ---
    max_w = max(op.shape[0] for op in padded_ops)
    needed = (2 * weight_bytes
              + 2 * F * tile_b * 4
              + 2 * tile_b * 4
              + 4 * max_w * tile_b * 4)
    try:  # per-generation cap: ~48 MiB on v7x (64 MiB phys), ~96 MiB on v5e/v6e (128 MiB)
        vmem_cap = int(pltpu.get_tpu_info().vmem_capacity_bytes)
    except Exception:
        vmem_cap = 64 << 20                            # v7x-safe fallback
    vmem_limit = min(max(int(needed * 1.5), 8 << 20), (vmem_cap * 3) // 4)

    out = pl.pallas_call(
        _mlp_kernel,
        out_shape=jax.ShapeDtypeStruct((1, b_pad), jnp.float32),
        grid=grid,
        in_specs=in_specs,
        out_specs=out_spec,
        compiler_params=pltpu.CompilerParams(
            dimension_semantics=("parallel",),
            vmem_limit_bytes=vmem_limit,
        ),
        cost_estimate=pl.CostEstimate(
            flops=flops, transcendentals=0, bytes_accessed=bytes_accessed),
    )(x_t, *padded_ops)

    return out[0, :B].reshape(B, 1)


def mlp_reference(x, params):
    """Pure-JAX f32 reference (unpadded) for correctness checking."""
    h = x
    for i, (w, b) in enumerate(params):
        h = jnp.dot(h, w, precision=jax.lax.Precision.HIGHEST) + b
        if i < len(params) - 1:
            h = jnp.maximum(h, 0.0)
    return h


if __name__ == "__main__":
    # MyModel(n_layers=2, layer_sizes=[64, 32]) applied to x of shape (256, 32).
    n_layers = 2
    layer_sizes = [64, 32]

    key = jax.random.PRNGKey(0)
    key_x, key_p = jax.random.split(key)
    x = jax.random.normal(key_x, (256, 32), dtype=jnp.float32)
    params = init_params(key_p, n_layers, layer_sizes, in_features=32)
    padded_ops = pad_params_for_kernel(params)         # bf16 hidden weights (MXU-native)

    out = mlp_forward(x, padded_ops)                    # B=256 -> tile_b=256, grid=(1,)
    out = jax.block_until_ready(out)

    ref = mlp_reference(x, params)
    assert out.shape == (256, 1), out.shape
    # Tolerance loosened vs f32 reference because hidden-layer MXU operands are bf16
    # (expected |err| ~1e-3 for this net; 2e-2 leaves ample margin).
    assert jnp.allclose(out, ref, atol=2e-2, rtol=2e-2), "mismatch vs reference"

    print("KERNEL_OK")
</pallas_src>

<mosaic_0001>
module attributes {stable_mosaic.version = 11 : i64} {
  func.func @_mlp_kernel(%arg0: i32, %arg1: memref<32x256xf32, #tpu.memory_space<vmem>>, %arg2: memref<128x32xbf16, #tpu.memory_space<vmem>>, %arg3: memref<128x1xf32, #tpu.memory_space<vmem>>, %arg4: memref<128x128xbf16, #tpu.memory_space<vmem>>, %arg5: memref<128x1xf32, #tpu.memory_space<vmem>>, %arg6: memref<1x128xf32, #tpu.memory_space<vmem>>, %arg7: memref<1x1xf32, #tpu.memory_space<vmem>>, %arg8: memref<1x256xf32, #tpu.memory_space<vmem>>) attributes {dimension_semantics = [#tpu.dimension_semantics<parallel>], iteration_bounds = array<i64: 1>, scalar_prefetch = 0 : i64, scratch_operands = 0 : i64, tpu.core_type = #tpu.core_type<tc>, window_params = [{transform_indices = @transform_0, window_bounds = array<i64: 32, 256>}, {pipeline_mode = #tpu.pipeline_mode<synchronous>, transform_indices = @transform_1, window_bounds = array<i64: 128, 32>}, {pipeline_mode = #tpu.pipeline_mode<synchronous>, transform_indices = @transform_2, window_bounds = array<i64: 128, 1>}, {pipeline_mode = #tpu.pipeline_mode<synchronous>, transform_indices = @transform_3, window_bounds = array<i64: 128, 128>}, {pipeline_mode = #tpu.pipeline_mode<synchronous>, transform_indices = @transform_4, window_bounds = array<i64: 128, 1>}, {pipeline_mode = #tpu.pipeline_mode<synchronous>, transform_indices = @transform_5, window_bounds = array<i64: 1, 128>}, {pipeline_mode = #tpu.pipeline_mode<synchronous>, transform_indices = @transform_6, window_bounds = array<i64: 1, 1>}, {transform_indices = @transform_7, window_bounds = array<i64: 1, 256>}]} {
    %c0 = arith.constant 0 : index
    %c0_0 = arith.constant 0 : index
    %0 = vector.load %arg1[%c0, %c0_0] : memref<32x256xf32, #tpu.memory_space<vmem>>, vector<32x256xf32>
    %c0_1 = arith.constant 0 : index
    %c0_2 = arith.constant 0 : index
    %1 = vector.load %arg2[%c0_1, %c0_2] : memref<128x32xbf16, #tpu.memory_space<vmem>>, vector<128x32xbf16>
    %c0_3 = arith.constant 0 : index
    %c0_4 = arith.constant 0 : index
    %2 = vector.load %arg3[%c0_3, %c0_4] : memref<128x1xf32, #tpu.memory_space<vmem>>, vector<128x1xf32>
    %3 = arith.truncf %0 : vector<32x256xf32> to vector<32x256xbf16>
    %cst = arith.constant dense<0.000000e+00> : vector<128x256xf32>
    %4 = tpu.matmul %1, %3, %cst {dimension_numbers = #tpu.dot_dimension_numbers<[1], [0], [0], [1], [0, 0, 1, 1], [], []>} : vector<128x32xbf16>, vector<32x256xbf16>, vector<128x256xf32> -> vector<128x256xf32>
    %5 = vector.broadcast %2 : vector<128x1xf32> to vector<128x256xf32>
    %6 = arith.addf %4, %5 : vector<128x256xf32>
    %cst_5 = arith.constant 0.000000e+00 : f32
    %7 = vector.broadcast %cst_5 : f32 to vector<128x256xf32>
    %8 = arith.maximumf %6, %7 : vector<128x256xf32>
    %c0_6 = arith.constant 0 : index
    %c0_7 = arith.constant 0 : index
    %9 = vector.load %arg4[%c0_6, %c0_7] : memref<128x128xbf16, #tpu.memory_space<vmem>>, vector<128x128xbf16>
    %c0_8 = arith.constant 0 : index
    %c0_9 = arith.constant 0 : index
    %10 = vector.load %arg5[%c0_8, %c0_9] : memref<128x1xf32, #tpu.memory_space<vmem>>, vector<128x1xf32>
    %11 = arith.truncf %8 : vector<128x256xf32> to vector<128x256xbf16>
    %cst_10 = arith.constant dense<0.000000e+00> : vector<128x256xf32>
    %12 = tpu.matmul %9, %11, %cst_10 {dimension_numbers = #tpu.dot_dimension_numbers<[1], [0], [0], [1], [0, 0, 1, 1], [], []>} : vector<128x128xbf16>, vector<128x256xbf16>, vector<128x256xf32> -> vector<128x256xf32>
    %13 = vector.broadcast %10 : vector<128x1xf32> to vector<128x256xf32>
    %14 = arith.addf %12, %13 : vector<128x256xf32>
    %cst_11 = arith.constant 0.000000e+00 : f32
    %15 = vector.broadcast %cst_11 : f32 to vector<128x256xf32>
    %16 = arith.maximumf %14, %15 : vector<128x256xf32>
    %c0_12 = arith.constant 0 : index
    %c0_13 = arith.constant 0 : index
    %17 = vector.load %arg6[%c0_12, %c0_13] : memref<1x128xf32, #tpu.memory_space<vmem>>, vector<1x128xf32>
    %c0_14 = arith.constant 0 : index
    %c0_15 = arith.constant 0 : index
    %18 = vector.load %arg7[%c0_14, %c0_15] : memref<1x1xf32, #tpu.memory_space<vmem>>, vector<1x1xf32>
    %cst_16 = arith.constant dense<0.000000e+00> : vector<1x256xf32>
    %19 = tpu.matmul %17, %16, %cst_16 {dimension_numbers = #tpu.dot_dimension_numbers<[1], [0], [0], [1], [0, 0, 1, 1], [], []>} : vector<1x128xf32>, vector<128x256xf32>, vector<1x256xf32> -> vector<1x256xf32>
    %20 = vector.broadcast %18 : vector<1x1xf32> to vector<1x256xf32>
    %21 = arith.addf %19, %20 : vector<1x256xf32>
    %c0_17 = arith.constant 0 : index
    %c0_18 = arith.constant 0 : index
    %22 = vector.load %arg8[%c0_17, %c0_18] : memref<1x256xf32, #tpu.memory_space<vmem>>, vector<1x256xf32>
    tpu.vector_store %arg8[%c0_17, %c0_18], %21 {strides = array<i32>} : memref<1x256xf32, #tpu.memory_space<vmem>>, vector<1x256xf32>,
    return
  }
  func.func @transform_0(%arg0: i32) -> (i32, i32) {
    %c0_i32 = arith.constant 0 : i32
    %c0_i32_0 = arith.constant 0 : i32
    return %c0_i32, %arg0 : i32, i32
  }
  func.func @transform_1(%arg0: i32) -> (i32, i32) {
    %c0_i32 = arith.constant 0 : i32
    %c0_i32_0 = arith.constant 0 : i32
    %c0_i32_1 = arith.constant 0 : i32
    return %c0_i32, %c0_i32_0 : i32, i32
  }
  func.func @transform_2(%arg0: i32) -> (i32, i32) {
    %c0_i32 = arith.constant 0 : i32
    %c0_i32_0 = arith.constant 0 : i32
    %c0_i32_1 = arith.constant 0 : i32
    return %c0_i32, %c0_i32_0 : i32, i32
  }
  func.func @transform_3(%arg0: i32) -> (i32, i32) {
    %c0_i32 = arith.constant 0 : i32
    %c0_i32_0 = arith.constant 0 : i32
    %c0_i32_1 = arith.constant 0 : i32
    return %c0_i32, %c0_i32_0 : i32, i32
  }
  func.func @transform_4(%arg0: i32) -> (i32, i32) {
    %c0_i32 = arith.constant 0 : i32
    %c0_i32_0 = arith.constant 0 : i32
    %c0_i32_1 = arith.constant 0 : i32
    return %c0_i32, %c0_i32_0 : i32, i32
  }
  func.func @transform_5(%arg0: i32) -> (i32, i32) {
    %c0_i32 = arith.constant 0 : i32
    %c0_i32_0 = arith.constant 0 : i32
    %c0_i32_1 = arith.constant 0 : i32
    return %c0_i32, %c0_i32_0 : i32, i32
  }
  func.func @transform_6(%arg0: i32) -> (i32, i32) {
    %c0_i32 = arith.constant 0 : i32
    %c0_i32_0 = arith.constant 0 : i32
    %c0_i32_1 = arith.constant 0 : i32
    return %c0_i32, %c0_i32_0 : i32, i32
  }
  func.func @transform_7(%arg0: i32) -> (i32, i32) {
    %c0_i32 = arith.constant 0 : i32
    %c0_i32_0 = arith.constant 0 : i32
    return %c0_i32, %arg0 : i32, i32
  }
}

</mosaic_0001>

<llo_original>
// kernel: tpu_custom_call.1
$region0: #{tpu_custom_call.1}
  #allocation0 [shape = 'u32[]', space=smem, size = 0x4, offset = 0x4, fixed_abs, tag = 'smem constant byte address 0x4 - core index']
  #allocation1 [shape = 'u32[144,128]{1,0:T(1,128)}', space=vmem, size = 0x12000, scoped, tag = 'internal scratch']
  #allocation2 [shape = 'f32[1,1]{1,0:T(1,128)S(1)}', space=vmem, size = 0x200, scoped, tag = 'scoped memory for tpu_custom_call.1']
  %s0 = inlined_call_operand.vmem [shape: f32[32,256], index: 0, kind: input, shape index: {}]
  %s1 = inlined_call_operand.vmem [shape: bf16[128,32], index: 1, kind: input, shape index: {}]
  %s2 = inlined_call_operand.vmem [shape: f32[128,1], index: 2, kind: input, shape index: {}]
  %s3 = inlined_call_operand.vmem [shape: bf16[128,128], index: 3, kind: input, shape index: {}]
  %s4 = inlined_call_operand.vmem [shape: f32[128,1], index: 4, kind: input, shape index: {}]
  %s5 = inlined_call_operand.vmem [shape: f32[1,128], index: 5, kind: input, shape index: {}]
  %s6 = inlined_call_operand.<no memory space> [shape: f32[1,1], index: 6, kind: input, shape index: {}]
  %s7 = inlined_call_operand.hbm [shape: f32[1,256], index: 7, kind: output, shape index: {}]
  %s8 = sld [smem:[#allocation0]]
  $region38: #{tpu_custom_call.1} parent=0
    _
  %s10 = ssub.s32 1, %s8
  %s11 = scalar_select 0, %s10, %s8
  %v12 = vstv %s6
  %13 = vst [vmem:[#allocation2] sm:$0x1] %v12
  $region1: #{tpu_custom_call.1} parent=0
    #allocation3 [shape = 'u8[1024]{0}', space=vmem, size = 0x400, scoped, tag = 'output window, operand 0, single buffered']
    #allocation4 [shape = 's32[1]{0}', space=sflag, size = 0x4, scoped, tag = 'scoped memory for tpu_custom_call.1']
    %14 = vsyncpa [#allocation4], 0
    // Predicated region
    $region2: #{tpu_custom_call.1} parent=1 // pred_check
      _
    $region3: #{tpu_custom_call.1} parent=1 // pred_check_branch
      %16 = sbr.rel (0) target = $region5
    $region4: #{tpu_custom_call.1} parent=1 // pred_region
      _
    $region5: #{tpu_custom_call.1} parent=1 // pred_fallthru
      _
    // Predicated region
    $region6: #{tpu_custom_call.1} parent=1 // pred_check
      _
    $region7: #{tpu_custom_call.1} parent=1 // pred_check_branch
      %18 = sbr.rel (0) target = $region9
    $region8: #{tpu_custom_call.1} parent=1 // pred_region
      _
    $region9: #{tpu_custom_call.1} parent=1 // pred_fallthru
      _
    // Predicated region
    $region10: #{tpu_custom_call.1} parent=1 // pred_check
      _
    $region11: #{tpu_custom_call.1} parent=1 // pred_check_branch
      %20 = sbr.rel (0) target = $region13
    $region12: #{tpu_custom_call.1} parent=1 // pred_region
      _
    $region13: #{tpu_custom_call.1} parent=1 // pred_fallthru
      _
    // Predicated region
    $region14: #{tpu_custom_call.1} parent=1 // pred_check
      _
    $region15: #{tpu_custom_call.1} parent=1 // pred_check_branch
      %22 = sbr.rel (0) target = $region17
    $region16: #{tpu_custom_call.1} parent=1 // pred_region
      _
    $region17: #{tpu_custom_call.1} parent=1 // pred_fallthru
      _
    // Predicated region
    $region18: #{tpu_custom_call.1} parent=1 // pred_check
      _
    $region19: #{tpu_custom_call.1} parent=1 // pred_check_branch
      %24 = sbr.rel (0) target = $region21
    $region20: #{tpu_custom_call.1} parent=1 // pred_region
      _
    $region21: #{tpu_custom_call.1} parent=1 // pred_fallthru
      _
    // Predicated region
    $region22: #{tpu_custom_call.1} parent=1 // pred_check
      _
    $region23: #{tpu_custom_call.1} parent=1 // pred_check_branch
      %26 = sbr.rel (0) target = $region25
    $region24: #{tpu_custom_call.1} parent=1 // pred_region
      _
    $region25: #{tpu_custom_call.1} parent=1 // pred_fallthru
      _
    // Predicated region
    $region26: #{tpu_custom_call.1} parent=1 // pred_check
      _
    $region27: #{tpu_custom_call.1} parent=1 // pred_check_branch
      %28 = sbr.rel (0) target = $region29
    $region28: #{tpu_custom_call.1} parent=1 // pred_region
      _
    $region29: #{tpu_custom_call.1} parent=1 // pred_fallthru
      _
    %v30 = vld [vmem:[%s0] sm:$0xff]
    %v31 = vld [vmem:[%s0 + $0x8] sm:$0xff]
    %v32 = vld [vmem:[%s0 + $0x10] sm:$0xff]
    %v33 = vld [vmem:[%s0 + $0x18] sm:$0xff]
    %v34 = vld [vmem:[%s0 + $0x20] sm:$0xff]
    %v35 = vld [vmem:[%s0 + $0x28] sm:$0xff]
    %v36 = vld [vmem:[%s0 + $0x30] sm:$0xff]
    %v37 = vld [vmem:[%s0 + $0x38] sm:$0xff]
    %v38 = vld [vmem:[%s1] sm:$0xf]
    %v39 = vld [vmem:[%s1 + $0x4] sm:$0xf]
    %v40 = vld [vmem:[%s1 + $0x8] sm:$0xf]
    %v41 = vld [vmem:[%s1 + $0xc] sm:$0xf]
    %v42 = vld [vmem:[%s1 + $0x10] sm:$0xf]
    %v43 = vld [vmem:[%s1 + $0x14] sm:$0xf]
    %v44 = vld [vmem:[%s1 + $0x18] sm:$0xf]
    %v45 = vld [vmem:[%s1 + $0x1c] sm:$0xf]
    %v46 = vld [vmem:[%s1 + $0x20] sm:$0xf]
    %v47 = vld [vmem:[%s1 + $0x24] sm:$0xf]
    %v48 = vld [vmem:[%s1 + $0x28] sm:$0xf]
    %v49 = vld [vmem:[%s1 + $0x2c] sm:$0xf]
    %v50 = vld [vmem:[%s1 + $0x30] sm:$0xf]
    %v51 = vld [vmem:[%s1 + $0x34] sm:$0xf]
    %v52 = vld [vmem:[%s1 + $0x38] sm:$0xf]
    %v53 = vld [vmem:[%s1 + $0x3c] sm:$0xf]
    %v54 = vld [vmem:[%s2] sm:$0xff]
    %v55 = vld [vmem:[%s2 + $0x8] sm:$0xff]
    %v56 = vld [vmem:[%s2 + $0x10] sm:$0xff]
    %v57 = vld [vmem:[%s2 + $0x18] sm:$0xff]
    %v58 = vld [vmem:[%s2 + $0x20] sm:$0xff]
    %v59 = vld [vmem:[%s2 + $0x28] sm:$0xff]
    %v60 = vld [vmem:[%s2 + $0x30] sm:$0xff]
    %v61 = vld [vmem:[%s2 + $0x38] sm:$0xff]
    %v62 = vld [vmem:[%s2 + $0x40] sm:$0xff]
    %v63 = vld [vmem:[%s2 + $0x48] sm:$0xff]
    %v64 = vld [vmem:[%s2 + $0x50] sm:$0xff]
    %v65 = vld [vmem:[%s2 + $0x58] sm:$0xff]
    %v66 = vld [vmem:[%s2 + $0x60] sm:$0xff]
    %v67 = vld [vmem:[%s2 + $0x68] sm:$0xff]
    %v68 = vld [vmem:[%s2 + $0x70] sm:$0xff]
    %v69 = vld [vmem:[%s2 + $0x78] sm:$0xff]
    %v70 = vpack.c.bf16 %v32, %v30
    %v71 = vpack.c.bf16 %v33, %v31
    %v72 = vpack.c.bf16 %v36, %v34
    %v73 = vpack.c.bf16 %v37, %v35
    %75 = vset.pattern.permute.xlu0 0
    %76 = vperm.xlu0 %75, %v54
    %v77 = vpop.permute.xlu0 %76
    %80 = vset.pattern.permute.xlu0 0
    %81 = vperm.xlu0 %80, %v55
    %v82 = vpop.permute.xlu0 %81
    %85 = vset.pattern.permute.xlu0 0
    %86 = vperm.xlu0 %85, %v56
    %v87 = vpop.permute.xlu0 %86
    %90 = vset.pattern.permute.xlu0 0
    %91 = vperm.xlu0 %90, %v57
    %v92 = vpop.permute.xlu0 %91
    %95 = vset.pattern.permute.xlu0 0
    %96 = vperm.xlu0 %95, %v58
    %v97 = vpop.permute.xlu0 %96
    %100 = vset.pattern.permute.xlu0 0
    %101 = vperm.xlu0 %100, %v59
    %v102 = vpop.permute.xlu0 %101
    %105 = vset.pattern.permute.xlu0 0
    %106 = vperm.xlu0 %105, %v60
    %v107 = vpop.permute.xlu0 %106
    %110 = vset.pattern.permute.xlu0 0
    %111 = vperm.xlu0 %110, %v61
    %v112 = vpop.permute.xlu0 %111
    %115 = vset.pattern.permute.xlu0 0
    %116 = vperm.xlu0 %115, %v62
    %v117 = vpop.permute.xlu0 %116
    %120 = vset.pattern.permute.xlu0 0
    %121 = vperm.xlu0 %120, %v63
    %v122 = vpop.permute.xlu0 %121
    %125 = vset.pattern.permute.xlu0 0
    %126 = vperm.xlu0 %125, %v64
    %v127 = vpop.permute.xlu0 %126
    %130 = vset.pattern.permute.xlu0 0
    %131 = vperm.xlu0 %130, %v65
    %v132 = vpop.permute.xlu0 %131
    %135 = vset.pattern.permute.xlu0 0
    %136 = vperm.xlu0 %135, %v66
    %v137 = vpop.permute.xlu0 %136
    %140 = vset.pattern.permute.xlu0 0
    %141 = vperm.xlu0 %140, %v67
    %v142 = vpop.permute.xlu0 %141
    %145 = vset.pattern.permute.xlu0 0
    %146 = vperm.xlu0 %145, %v68
    %v147 = vpop.permute.xlu0 %146
    %150 = vset.pattern.permute.xlu0 0
    %151 = vperm.xlu0 %150, %v69
    %v152 = vpop.permute.xlu0 %151
    %v170 = vunpack.c.l.b16 %v38
    %v171 = vunpack.c.l.b16 %v39
    %v172 = vunpack.c.l.b16 %v40
    %v173 = vunpack.c.l.b16 %v41
    %v174 = vunpack.c.l.b16 %v42
    %v175 = vunpack.c.l.b16 %v43
    %v176 = vunpack.c.l.b16 %v44
    %v177 = vunpack.c.l.b16 %v45
    %v178 = vunpack.c.l.b16 %v46
    %v179 = vunpack.c.l.b16 %v47
    %v180 = vunpack.c.l.b16 %v48
    %v181 = vunpack.c.l.b16 %v49
    %v182 = vunpack.c.l.b16 %v50
    %v183 = vunpack.c.l.b16 %v51
    %v184 = vunpack.c.l.b16 %v52
    %v185 = vunpack.c.l.b16 %v53
    %v186 = vpack.c.b16 %v171, %v170
    %v187 = vpack.c.b16 %v173, %v172
    %v188 = vpack.c.b16 %v175, %v174
    %v189 = vpack.c.b16 %v177, %v176
    %v190 = vpack.c.b16 %v179, %v178
    %v191 = vpack.c.b16 %v181, %v180
    %v192 = vpack.c.b16 %v183, %v182
    %v193 = vpack.c.b16 %v185, %v184
    %vm194 = vcmask 261120
    %v196 = vsel %vm194, %v186, 0
    %v199 = vsel %vm194, %v187, 0
    %v202 = vsel %vm194, %v188, 0
    %v205 = vsel %vm194, %v189, 0
    %v208 = vsel %vm194, %v190, 0
    %v211 = vsel %vm194, %v191, 0
    %v214 = vsel %vm194, %v192, 0
    %v217 = vsel %vm194, %v193, 0
    %219 = vmatprep.subr.bf16.mxu0 %v71
    %220 = vmatpush1.bf16.msra.mxu0 %v70
    %221 = vmatprep.subr.bf16.mxu0 %v73
    %222 = vmatpush1.bf16.msra.mxu0 %v72
    %223 = vmatprep.subr.bf16.mxu0 0
    %224 = vmatpush1.bf16.msra.mxu0 0
    %225 = vmatprep.subr.bf16.mxu0 0
    %226 = vmatpush1.bf16.msra.mxu0 0
    %227 = vmatprep.subr.bf16.mxu0 0
    %228 = vmatpush1.bf16.msra.mxu0 0
    %229 = vmatprep.subr.bf16.mxu0 0
    %230 = vmatpush1.bf16.msra.mxu0 0
    %231 = vmatprep.subr.bf16.mxu0 0
    %232 = vmatpush1.bf16.msra.mxu0 0
    %233 = vmatprep.subr.bf16.mxu0 0
    %234 = vmatpush1.bf16.msra.mxu0 0
    %235 = vmatprep.subr.bf16.mxu0 0
    %236 = vmatpush1.bf16.msra.mxu0 0
    %237 = vmatprep.subr.bf16.mxu0 0
    %238 = vmatpush1.bf16.msra.mxu0 0
    %239 = vmatprep.subr.bf16.mxu0 0
    %240 = vmatpush1.bf16.msra.mxu0 0
    %241 = vmatprep.subr.bf16.mxu0 0
    %242 = vmatpush1.bf16.msra.mxu0 0
    %243 = vmatprep.subr.bf16.mxu0 0
    %244 = vmatpush1.bf16.msra.mxu0 0
    %245 = vmatprep.subr.bf16.mxu0 0
    %246 = vmatpush1.bf16.msra.mxu0 0
    %247 = vmatprep.subr.bf16.mxu0 0
    %248 = vmatpush1.bf16.msra.mxu0 0
    %249 = vmatprep.subr.bf16.mxu0 0
    %250 = vmatpush1.bf16.msra.mxu0 0
    %251 = vmatprep.mubr.bf16.mxu0 0
    %252 = vmatmul.mubr.bf16.gmra.mrb[0].mxu0 %v196
    %v253 = vpop.f32.mrb[0].mxu0
    %v254 = vadd.f32 %v77, %v253
    %v255 = vpop.f32.mrb[0].mxu0
    %v256 = vadd.f32 %v77, %v255
    %v257 = vpop.f32.mrb[0].mxu0
    %v258 = vadd.f32 %v82, %v257
    %v259 = vpop.f32.mrb[0].mxu0
    %v260 = vadd.f32 %v82, %v259
    %261 = vmatprep.mubr.bf16.mxu0 0
    %262 = vmatmul.mubr.bf16.gmra.mrb[0].mxu0 %v199
    %v263 = vpop.f32.mrb[0].mxu0
    %v264 = vadd.f32 %v87, %v263
    %v265 = vpop.f32.mrb[0].mxu0
    %v266 = vadd.f32 %v87, %v265
    %v267 = vpop.f32.mrb[0].mxu0
    %v268 = vadd.f32 %v92, %v267
    %v269 = vpop.f32.mrb[0].mxu0
    %v270 = vadd.f32 %v92, %v269
    %271 = vmatprep.mubr.bf16.mxu0 0
    %272 = vmatmul.mubr.bf16.gmra.mrb[0].mxu0 %v202
    %v273 = vpop.f32.mrb[0].mxu0
    %v274 = vadd.f32 %v97, %v273
    %v275 = vpop.f32.mrb[0].mxu0
    %v276 = vadd.f32 %v97, %v275
    %v277 = vpop.f32.mrb[0].mxu0
    %v278 = vadd.f32 %v102, %v277
    %v279 = vpop.f32.mrb[0].mxu0
    %v280 = vadd.f32 %v102, %v279
    %281 = vmatprep.mubr.bf16.mxu0 0
    %282 = vmatmul.mubr.bf16.gmra.mrb[0].mxu0 %v205
    %v283 = vpop.f32.mrb[0].mxu0
    %v284 = vadd.f32 %v107, %v283
    %v285 = vpop.f32.mrb[0].mxu0
    %v286 = vadd.f32 %v107, %v285
    %v287 = vpop.f32.mrb[0].mxu0
    %v288 = vadd.f32 %v112, %v287
    %v289 = vpop.f32.mrb[0].mxu0
    %v290 = vadd.f32 %v112, %v289
    %291 = vmatprep.mubr.bf16.mxu0 0
    %292 = vmatmul.mubr.bf16.gmra.mrb[0].mxu0 %v208
    %v293 = vpop.f32.mrb[0].mxu0
    %v294 = vadd.f32 %v117, %v293
    %v295 = vpop.f32.mrb[0].mxu0
    %v296 = vadd.f32 %v117, %v295
    %v297 = vpop.f32.mrb[0].mxu0
    %v298 = vadd.f32 %v122, %v297
    %v299 = vpop.f32.mrb[0].mxu0
    %v300 = vadd.f32 %v122, %v299
    %301 = vmatprep.mubr.bf16.mxu0 0
    %302 = vmatmul.mubr.bf16.gmra.mrb[0].mxu0 %v211
    %v303 = vpop.f32.mrb[0].mxu0
    %v304 = vadd.f32 %v127, %v303
    %v305 = vpop.f32.mrb[0].mxu0
    %v306 = vadd.f32 %v127, %v305
    %v307 = vpop.f32.mrb[0].mxu0
    %v308 = vadd.f32 %v132, %v307
    %v309 = vpop.f32.mrb[0].mxu0
    %v310 = vadd.f32 %v132, %v309
    %311 = vmatprep.mubr.bf16.mxu0 0
    %312 = vmatmul.mubr.bf16.gmra.mrb[0].mxu0 %v214
    %v313 = vpop.f32.mrb[0].mxu0
    %v314 = vadd.f32 %v137, %v313
    %v315 = vpop.f32.mrb[0].mxu0
    %v316 = vadd.f32 %v137, %v315
    %v317 = vpop.f32.mrb[0].mxu0
    %v318 = vadd.f32 %v142, %v317
    %v319 = vpop.f32.mrb[0].mxu0
    %v320 = vadd.f32 %v142, %v319
    %321 = vmatprep.mubr.bf16.mxu0 0
    %322 = vmatmul.mubr.bf16.gmra.mrb[0].mxu0 %v217
    %v323 = vpop.f32.mrb[0].mxu0
    %v324 = vadd.f32 %v147, %v323
    %v325 = vpop.f32.mrb[0].mxu0
    %v326 = vadd.f32 %v147, %v325
    %v327 = vpop.f32.mrb[0].mxu0
    %v328 = vadd.f32 %v152, %v327
    %v329 = vpop.f32.mrb[0].mxu0
    %v330 = vadd.f32 %v152, %v329
    %331 = vdwg.mxu0
    %v332 = vmax.f32 %v254, 0.0
    %v333 = vmax.f32 %v256, 0.0
    %v334 = vmax.f32 %v258, 0.0
    %v335 = vmax.f32 %v260, 0.0
    %v336 = vmax.f32 %v264, 0.0
    %v337 = vmax.f32 %v266, 0.0
    %v338 = vmax.f32 %v268, 0.0
    %v339 = vmax.f32 %v270, 0.0
    %v340 = vmax.f32 %v274, 0.0
    %v341 = vmax.f32 %v276, 0.0
    %v342 = vmax.f32 %v278, 0.0
    %v343 = vmax.f32 %v280, 0.0
    %v344 = vmax.f32 %v284, 0.0
    %v345 = vmax.f32 %v286, 0.0
    %v346 = vmax.f32 %v288, 0.0
    %v347 = vmax.f32 %v290, 0.0
    %v348 = vmax.f32 %v294, 0.0
    %v349 = vmax.f32 %v296, 0.0
    %v350 = vmax.f32 %v298, 0.0
    %v351 = vmax.f32 %v300, 0.0
    %v352 = vmax.f32 %v304, 0.0
    %v353 = vmax.f32 %v306, 0.0
    %v354 = vmax.f32 %v308, 0.0
    %v355 = vmax.f32 %v310, 0.0
    %v356 = vmax.f32 %v314, 0.0
    %v357 = vmax.f32 %v316, 0.0
    %v358 = vmax.f32 %v318, 0.0
    %v359 = vmax.f32 %v320, 0.0
    %v360 = vmax.f32 %v324, 0.0
    %v361 = vmax.f32 %v326, 0.0
    %v362 = vmax.f32 %v328, 0.0
    %v363 = vmax.f32 %v330, 0.0
    %v364 = vld [vmem:[%s3] sm:$0xf]
    %v365 = vld [vmem:[%s3 + $0x4] sm:$0xf]
    %v366 = vld [vmem:[%s3 + $0x8] sm:$0xf]
    %v367 = vld [vmem:[%s3 + $0xc] sm:$0xf]
    %v368 = vld [vmem:[%s3 + $0x10] sm:$0xf]
    %v369 = vld [vmem:[%s3 + $0x14] sm:$0xf]
    %v370 = vld [vmem:[%s3 + $0x18] sm:$0xf]
    %v371 = vld [vmem:[%s3 + $0x1c] sm:$0xf]
    %v372 = vld [vmem:[%s3 + $0x20] sm:$0xf]
    %v373 = vld [vmem:[%s3 + $0x24] sm:$0xf]
    %v374 = vld [vmem:[%s3 + $0x28] sm:$0xf]
    %v375 = vld [vmem:[%s3 + $0x2c] sm:$0xf]
    %v376 = vld [vmem:[%s3 + $0x30] sm:$0xf]
    %v377 = vld [vmem:[%s3 + $0x34] sm:$0xf]
    %v378 = vld [vmem:[%s3 + $0x38] sm:$0xf]
    %v379 = vld [vmem:[%s3 + $0x3c] sm:$0xf]
    %v380 = vld [vmem:[%s4] sm:$0xff]
    %v381 = vld [vmem:[%s4 + $0x8] sm:$0xff]
    %v382 = vld [vmem:[%s4 + $0x10] sm:$0xff]
    %v383 = vld [vmem:[%s4 + $0x18] sm:$0xff]
    %v384 = vld [vmem:[%s4 + $0x20] sm:$0xff]
    %v385 = vld [vmem:[%s4 + $0x28] sm:$0xff]
    %v386 = vld [vmem:[%s4 + $0x30] sm:$0xff]
    %v387 = vld [vmem:[%s4 + $0x38] sm:$0xff]
    %v388 = vld [vmem:[%s4 + $0x40] sm:$0xff]
    %v389 = vld [vmem:[%s4 + $0x48] sm:$0xff]
    %v390 = vld [vmem:[%s4 + $0x50] sm:$0xff]
    %v391 = vld [vmem:[%s4 + $0x58] sm:$0xff]
    %v392 = vld [vmem:[%s4 + $0x60] sm:$0xff]
    %v393 = vld [vmem:[%s4 + $0x68] sm:$0xff]
    %v394 = vld [vmem:[%s4 + $0x70] sm:$0xff]
    %v395 = vld [vmem:[%s4 + $0x78] sm:$0xff]
    %v396 = vpack.c.bf16 %v334, %v332
    %v397 = vpack.c.bf16 %v335, %v333
    %v398 = vpack.c.bf16 %v338, %v336
    %v399 = vpack.c.bf16 %v339, %v337
    %v400 = vpack.c.bf16 %v342, %v340
    %v401 = vpack.c.bf16 %v343, %v341
    %v402 = vpack.c.bf16 %v346, %v344
    %v403 = vpack.c.bf16 %v347, %v345
    %v404 = vpack.c.bf16 %v350, %v348
    %v405 = vpack.c.bf16 %v351, %v349
    %v406 = vpack.c.bf16 %v354, %v352
    %v407 = vpack.c.bf16 %v355, %v353
    %v408 = vpack.c.bf16 %v358, %v356
    %v409 = vpack.c.bf16 %v359, %v357
    %v410 = vpack.c.bf16 %v362, %v360
    %v411 = vpack.c.bf16 %v363, %v361
    %413 = vset.pattern.permute.xlu0 0
    %414 = vperm.xlu0 %413, %v380
    %v415 = vpop.permute.xlu0 %414
    %418 = vset.pattern.permute.xlu0 0
    %419 = vperm.xlu0 %418, %v381
    %v420 = vpop.permute.xlu0 %419
    %423 = vset.pattern.permute.xlu0 0
    %424 = vperm.xlu0 %423, %v382
    %v425 = vpop.permute.xlu0 %424
    %428 = vset.pattern.permute.xlu0 0
    %429 = vperm.xlu0 %428, %v383
    %v430 = vpop.permute.xlu0 %429
    %433 = vset.pattern.permute.xlu0 0
    %434 = vperm.xlu0 %433, %v384
    %v435 = vpop.permute.xlu0 %434
    %438 = vset.pattern.permute.xlu0 0
    %439 = vperm.xlu0 %438, %v385
    %v440 = vpop.permute.xlu0 %439
    %443 = vset.pattern.permute.xlu0 0
    %444 = vperm.xlu0 %443, %v386
    %v445 = vpop.permute.xlu0 %444
    %448 = vset.pattern.permute.xlu0 0
    %449 = vperm.xlu0 %448, %v387
    %v450 = vpop.permute.xlu0 %449
    %453 = vset.pattern.permute.xlu0 0
    %454 = vperm.xlu0 %453, %v388
    %v455 = vpop.permute.xlu0 %454
    %458 = vset.pattern.permute.xlu0 0
    %459 = vperm.xlu0 %458, %v389
    %v460 = vpop.permute.xlu0 %459
    %463 = vset.pattern.permute.xlu0 0
    %464 = vperm.xlu0 %463, %v390
    %v465 = vpop.permute.xlu0 %464
    %468 = vset.pattern.permute.xlu0 0
    %469 = vperm.xlu0 %468, %v391
    %v470 = vpop.permute.xlu0 %469
    %473 = vset.pattern.permute.xlu0 0
    %474 = vperm.xlu0 %473, %v392
    %v475 = vpop.permute.xlu0 %474
    %478 = vset.pattern.permute.xlu0 0
    %479 = vperm.xlu0 %478, %v393
    %v480 = vpop.permute.xlu0 %479
    %483 = vset.pattern.permute.xlu0 0
    %484 = vperm.xlu0 %483, %v394
    %v485 = vpop.permute.xlu0 %484
    %488 = vset.pattern.permute.xlu0 0
    %489 = vperm.xlu0 %488, %v395
    %v490 = vpop.permute.xlu0 %489
    %v508 = vunpack.c.l.b16 %v364
    %v509 = vunpack.c.l.b16 %v365
    %v510 = vunpack.c.l.b16 %v366
    %v511 = vunpack.c.l.b16 %v367
    %v512 = vunpack.c.l.b16 %v368
    %v513 = vunpack.c.l.b16 %v369
    %v514 = vunpack.c.l.b16 %v370
    %v515 = vunpack.c.l.b16 %v371
    %v516 = vunpack.c.l.b16 %v372
    %v517 = vunpack.c.l.b16 %v373
    %v518 = vunpack.c.l.b16 %v374
    %v519 = vunpack.c.l.b16 %v375
    %v520 = vunpack.c.l.b16 %v376
    %v521 = vunpack.c.l.b16 %v377
    %v522 = vunpack.c.l.b16 %v378
    %v523 = vunpack.c.l.b16 %v379
    %v524 = vpack.c.b16 %v509, %v508
    %v525 = vpack.c.b16 %v511, %v510
    %v526 = vpack.c.b16 %v513, %v512
    %v527 = vpack.c.b16 %v515, %v514
    %v528 = vpack.c.b16 %v517, %v516
    %v529 = vpack.c.b16 %v519, %v518
    %v530 = vpack.c.b16 %v521, %v520
    %v531 = vpack.c.b16 %v523, %v522
    %540 = vmatprep.subr.bf16.mxu0 %v397
    %541 = vmatpush1.bf16.msra.mxu0 %v396
    %542 = vmatprep.subr.bf16.mxu0 %v399
    %543 = vmatpush1.bf16.msra.mxu0 %v398
    %544 = vmatprep.subr.bf16.mxu0 %v401
    %545 = vmatpush1.bf16.msra.mxu0 %v400
    %546 = vmatprep.subr.bf16.mxu0 %v403
    %547 = vmatpush1.bf16.msra.mxu0 %v402
    %548 = vmatprep.subr.bf16.mxu0 %v405
    %549 = vmatpush1.bf16.msra.mxu0 %v404
    %550 = vmatprep.subr.bf16.mxu0 %v407
    %551 = vmatpush1.bf16.msra.mxu0 %v406
    %552 = vmatprep.subr.bf16.mxu0 %v409
    %553 = vmatpush1.bf16.msra.mxu0 %v408
    %554 = vmatprep.subr.bf16.mxu0 %v411
    %555 = vmatpush1.bf16.msra.mxu0 %v410
    %556 = vmatprep.subr.bf16.mxu0 0
    %557 = vmatpush1.bf16.msra.mxu0 0
    %558 = vmatprep.subr.bf16.mxu0 0
    %559 = vmatpush1.bf16.msra.mxu0 0
    %560 = vmatprep.subr.bf16.mxu0 0
    %561 = vmatpush1.bf16.msra.mxu0 0
    %562 = vmatprep.subr.bf16.mxu0 0
    %563 = vmatpush1.bf16.msra.mxu0 0
    %564 = vmatprep.subr.bf16.mxu0 0
    %565 = vmatpush1.bf16.msra.mxu0 0
    %566 = vmatprep.subr.bf16.mxu0 0
    %567 = vmatpush1.bf16.msra.mxu0 0
    %568 = vmatprep.subr.bf16.mxu0 0
    %569 = vmatpush1.bf16.msra.mxu0 0
    %570 = vmatprep.subr.bf16.mxu0 0
    %571 = vmatpush1.bf16.msra.mxu0 0
    %572 = vmatprep.mubr.bf16.mxu0 0
    %573 = vmatmul.mubr.bf16.gmra.mrb[0].mxu0 %v524
    %v574 = vpop.f32.mrb[0].mxu0
    %v575 = vadd.f32 %v415, %v574
    %v576 = vpop.f32.mrb[0].mxu0
    %v577 = vadd.f32 %v415, %v576
    %v578 = vpop.f32.mrb[0].mxu0
    %v579 = vadd.f32 %v420, %v578
    %v580 = vpop.f32.mrb[0].mxu0
    %v581 = vadd.f32 %v420, %v580
    %582 = vmatprep.mubr.bf16.mxu0 0
    %583 = vmatmul.mubr.bf16.gmra.mrb[0].mxu0 %v525
    %v584 = vpop.f32.mrb[0].mxu0
    %v585 = vadd.f32 %v425, %v584
    %v586 = vpop.f32.mrb[0].mxu0
    %v587 = vadd.f32 %v425, %v586
    %v588 = vpop.f32.mrb[0].mxu0
    %v589 = vadd.f32 %v430, %v588
    %v590 = vpop.f32.mrb[0].mxu0
    %v591 = vadd.f32 %v430, %v590
    %592 = vmatprep.mubr.bf16.mxu0 0
    %593 = vmatmul.mubr.bf16.gmra.mrb[0].mxu0 %v526
    %v594 = vpop.f32.mrb[0].mxu0
    %v595 = vadd.f32 %v435, %v594
    %v596 = vpop.f32.mrb[0].mxu0
    %v597 = vadd.f32 %v435, %v596
    %v598 = vpop.f32.mrb[0].mxu0
    %v599 = vadd.f32 %v440, %v598
    %v600 = vpop.f32.mrb[0].mxu0
    %v601 = vadd.f32 %v440, %v600
    %602 = vmatprep.mubr.bf16.mxu0 0
    %603 = vmatmul.mubr.bf16.gmra.mrb[0].mxu0 %v527
    %v604 = vpop.f32.mrb[0].mxu0
    %v605 = vadd.f32 %v445, %v604
    %v606 = vpop.f32.mrb[0].mxu0
    %v607 = vadd.f32 %v445, %v606
    %v608 = vpop.f32.mrb[0].mxu0
    %v609 = vadd.f32 %v450, %v608
    %v610 = vpop.f32.mrb[0].mxu0
    %v611 = vadd.f32 %v450, %v610
    %612 = vmatprep.mubr.bf16.mxu0 0
    %613 = vmatmul.mubr.bf16.gmra.mrb[0].mxu0 %v528
    %v614 = vpop.f32.mrb[0].mxu0
    %v615 = vadd.f32 %v455, %v614
    %v616 = vpop.f32.mrb[0].mxu0
    %v617 = vadd.f32 %v455, %v616
    %v618 = vpop.f32.mrb[0].mxu0
    %v619 = vadd.f32 %v460, %v618
    %v620 = vpop.f32.mrb[0].mxu0
    %v621 = vadd.f32 %v460, %v620
    %622 = vmatprep.mubr.bf16.mxu0 0
    %623 = vmatmul.mubr.bf16.gmra.mrb[0].mxu0 %v529
    %v624 = vpop.f32.mrb[0].mxu0
    %v625 = vadd.f32 %v465, %v624
    %v626 = vpop.f32.mrb[0].mxu0
    %v627 = vadd.f32 %v465, %v626
    %v628 = vpop.f32.mrb[0].mxu0
    %v629 = vadd.f32 %v470, %v628
    %v630 = vpop.f32.mrb[0].mxu0
    %v631 = vadd.f32 %v470, %v630
    %632 = vmatprep.mubr.bf16.mxu0 0
    %633 = vmatmul.mubr.bf16.gmra.mrb[0].mxu0 %v530
    %v634 = vpop.f32.mrb[0].mxu0
    %v635 = vadd.f32 %v475, %v634
    %v636 = vpop.f32.mrb[0].mxu0
    %v637 = vadd.f32 %v475, %v636
    %v638 = vpop.f32.mrb[0].mxu0
    %v639 = vadd.f32 %v480, %v638
    %v640 = vpop.f32.mrb[0].mxu0
    %v641 = vadd.f32 %v480, %v640
    %642 = vmatprep.mubr.bf16.mxu0 0
    %643 = vmatmul.mubr.bf16.gmra.mrb[0].mxu0 %v531
    %v644 = vpop.f32.mrb[0].mxu0
    %v645 = vadd.f32 %v485, %v644
    %v646 = vpop.f32.mrb[0].mxu0
    %v647 = vadd.f32 %v485, %v646
    %v648 = vpop.f32.mrb[0].mxu0
    %v649 = vadd.f32 %v490, %v648
    %v650 = vpop.f32.mrb[0].mxu0
    %v651 = vadd.f32 %v490, %v650
    %652 = vdwg.mxu0
    %v653 = vmax.f32 %v575, 0.0
    %v654 = vmax.f32 %v577, 0.0
    %v655 = vmax.f32 %v579, 0.0
    %v656 = vmax.f32 %v581, 0.0
    %v657 = vmax.f32 %v585, 0.0
    %v658 = vmax.f32 %v587, 0.0
    %v659 = vmax.f32 %v589, 0.0
    %v660 = vmax.f32 %v591, 0.0
    %v661 = vmax.f32 %v595, 0.0
    %v662 = vmax.f32 %v597, 0.0
    %v663 = vmax.f32 %v599, 0.0
    %v664 = vmax.f32 %v601, 0.0
    %v665 = vmax.f32 %v605, 0.0
    %v666 = vmax.f32 %v607, 0.0
    %v667 = vmax.f32 %v609, 0.0
    %v668 = vmax.f32 %v611, 0.0
    %v669 = vmax.f32 %v615, 0.0
    %v670 = vmax.f32 %v617, 0.0
    %v671 = vmax.f32 %v619, 0.0
    %v672 = vmax.f32 %v621, 0.0
    %v673 = vmax.f32 %v625, 0.0
    %v674 = vmax.f32 %v627, 0.0
    %v675 = vmax.f32 %v629, 0.0
    %v676 = vmax.f32 %v631, 0.0
    %v677 = vmax.f32 %v635, 0.0
    %v678 = vmax.f32 %v637, 0.0
    %v679 = vmax.f32 %v639, 0.0
    %v680 = vmax.f32 %v641, 0.0
    %v681 = vmax.f32 %v645, 0.0
    %v682 = vmax.f32 %v647, 0.0
    %v683 = vmax.f32 %v649, 0.0
    %v684 = vmax.f32 %v651, 0.0
    %v685 = vld [vmem:[%s5] sm:$0x1]
    %v686 = vld [vmem:[#allocation2] sm:$0x1]
    %688 = vset.pattern.permute.xlu0 0
    %689 = vperm.xlu0 %688, %v686
    %v690 = vpop.permute.xlu0 %689
    %v692 = vlaneseq
    %v693 = vshrl.u32 %v692, 7
    %v694 = vsub.s32 0, %v693
    %v695 = vrot.slane %v690, %v694
    %696 = vmatprep.subr.mxu0 %v654
    %697 = vmatpush1.msra.mxu0 %v653
    %698 = vmatprep.subr.mxu0 %v656
    %699 = vmatpush1.msra.mxu0 %v655
    %700 = vmatprep.subr.mxu0 %v658
    %701 = vmatpush1.msra.mxu0 %v657
    %702 = vmatprep.subr.mxu0 %v660
    %703 = vmatpush1.msra.mxu0 %v659
    %704 = vmatprep.subr.mxu0 %v662
    %705 = vmatpush1.msra.mxu0 %v661
    %706 = vmatprep.subr.mxu0 %v664
    %707 = vmatpush1.msra.mxu0 %v663
    %708 = vmatprep.subr.mxu0 %v666
    %709 = vmatpush1.msra.mxu0 %v665
    %710 = vmatprep.subr.mxu0 %v668
    %711 = vmatpush1.msra.mxu0 %v667
    %712 = vmatprep.subr.mxu0 %v670
    %713 = vmatpush1.msra.mxu0 %v669
    %714 = vmatprep.subr.mxu0 %v672
    %715 = vmatpush1.msra.mxu0 %v671
    %716 = vmatprep.subr.mxu0 %v674
    %717 = vmatpush1.msra.mxu0 %v673
    %718 = vmatprep.subr.mxu0 %v676
    %719 = vmatpush1.msra.mxu0 %v675
    %720 = vmatprep.subr.mxu0 %v678
    %721 = vmatpush1.msra.mxu0 %v677
    %722 = vmatprep.subr.mxu0 %v680
    %723 = vmatpush1.msra.mxu0 %v679
    %724 = vmatprep.subr.mxu0 %v682
    %725 = vmatpush1.msra.mxu0 %v681
    %726 = vmatprep.subr.mxu0 %v684
    %727 = vmatpush1.msra.mxu0 %v683
    %728 = vmatprep.subr.mxu0 0.0
    %729 = vmatpush1.msra.mxu0 0.0
    %730 = vmatprep.subr.mxu0 0.0
    %731 = vmatpush1.msra.mxu0 0.0
    %732 = vmatprep.subr.mxu0 0.0
    %733 = vmatpush1.msra.mxu0 0.0
    %734 = vmatprep.subr.mxu0 0.0
    %735 = vmatpush1.msra.mxu0 0.0
    %736 = vmatprep.subr.mxu0 0.0
    %737 = vmatpush1.msra.mxu0 0.0
    %738 = vmatprep.subr.mxu0 0.0
    %739 = vmatpush1.msra.mxu0 0.0
    %740 = vmatprep.subr.mxu0 0.0
    %741 = vmatpush1.msra.mxu0 0.0
    %742 = vmatprep.subr.mxu0 0.0
    %743 = vmatpush1.msra.mxu0 0.0
    %744 = vmatprep.subr.mxu0 0.0
    %745 = vmatpush1.msra.mxu0 0.0
    %746 = vmatprep.subr.mxu0 0.0
    %747 = vmatpush1.msra.mxu0 0.0
    %748 = vmatprep.subr.mxu0 0.0
    %749 = vmatpush1.msra.mxu0 0.0
    %750 = vmatprep.subr.mxu0 0.0
    %751 = vmatpush1.msra.mxu0 0.0
    %752 = vmatprep.subr.mxu0 0.0
    %753 = vmatpush1.msra.mxu0 0.0
    %754 = vmatprep.subr.mxu0 0.0
    %755 = vmatpush1.msra.mxu0 0.0
    %756 = vmatprep.subr.mxu0 0.0
    %757 = vmatpush1.msra.mxu0 0.0
    %758 = vmatprep.subr.mxu0 0.0
    %759 = vmatpush1.msra.mxu0 0.0
    %760 = vmatprep.mubr.f32.mxu0 0.0
    %761 = vmatmul.mubr.f32.gmra.mrb[0].mxu0 %v685
    %v762 = vpop.f32.mrb[0].mxu0
    %v763 = vadd.f32 %v695, %v762
    %v764 = vpop.f32.mrb[0].mxu0
    %v765 = vadd.f32 %v695, %v764
    %766 = vdwg.mxu0
    %v769 = vcombine.low %v763, %v765
    %v771 = vunpack.c.l.s4 1966171168
    %v772 = vunpack.c.0.s8 %v771
    %v773 = vlaneseq
    %v774 = vshrl.u32 %v773, 7
    %v775 = vsub.s32 %v772, %v774
    %v776 = vrot.slane %v769, %v775
    %v778 = vunpack.c.l.s4 1966171168
    %v779 = vunpack.c.0.s8 %v778
    %v780 = vlaneseq
    %v781 = vshrl.u32 %v780, 7
    %v782 = vsub.s32 %v779, %v781
    %v783 = vrot.slane %v776, %v782
    %v785 = vlaneseq
    %vm786 = vcmp.ge.s32.totalorder %v785, 0
    %vm787 = vcmp.lt.s32.totalorder %v785, 256
    %vm788 = vmand %vm786, %vm787
    %789 = vst.msk [vmem:[#allocation3] sm:$0x3] %vm788, %v783
    // Predicated region
    $region30: #{tpu_custom_call.1} parent=1 // pred_check
      _
    $region31: #{tpu_custom_call.1} parent=1 // pred_check_branch
      %791 = sbr.rel (0) target = $region33
    $region32: #{tpu_custom_call.1} parent=1 // pred_region
      %s793 = ssub.s32 32, 32
      %794 = vsyncadd [#allocation4], %s793
      %s796 = sshll.u32 [#allocation3], 4
      %s797 = int_to_ptr.vmem [resolvable:$true] %s796
      %799 = dma.vmem_to_hbm [thread:$0]  %s797, 32, %s7, [#allocation4]
    $region33: #{tpu_custom_call.1} parent=1 // pred_fallthru
      _
    // Predicated region
    $region34: #{tpu_custom_call.1} parent=1 // pred_check
      _
    $region35: #{tpu_custom_call.1} parent=1 // pred_check_branch
      %801 = sbr.rel (0) target = $region37
    $region36: #{tpu_custom_call.1} parent=1 // pred_region
      %802 = dma.done [#allocation4], 32
    $region37: #{tpu_custom_call.1} parent=1 // pred_fallthru
      _
    %803 = vsyncpa [#allocation4], 1

</llo_original>
